<compile_context>
chip_gen: v5e
topology: v5e:2x2
jax: 0.10.0
libtpu: 0.0.40
codegen_flags: <defaults>
</compile_context>

<pallas_src>
import functools

import jax
import jax.numpy as jnp
from jax.experimental import pallas as pl
from jax.experimental.pallas import tpu as pltpu

CONV_K = 12    # nn.Conv1d(kernel_size=12, stride=1, padding=0)
POOL_K = 12    # nn.MaxPool1d(kernel_size=12, stride=5, padding=0)
POOL_S = 5
OUT_PAD = 128  # lane-dense logit width (padded classes)
NEG_BIG = -1e30


def _round_up(n, m):
    return (n + m - 1) // m * m


def _cdiv(a, b):
    return (a + b - 1) // b


def _cnn_kernel(x_ref, wpool_ref, cb_ref, w1t_ref, b1_ref, w2t_ref, b2_ref, o_ref,
                *, compute_dtype):
    """x_ref: (bb, L*Cin) compute_dtype (raw activations, flattened).
    wpool_ref: (POOL_K, L*Cin, Lp*H) — fused conv+pool weight, VMEM-resident.
    Everything elementwise runs in f32; only MXU operands are compute_dtype."""
    x = x_ref[...]                                                     # (bb, F)

    # --- Conv1d + MaxPool1d fused ------------------------------------------------
    # wpool[i] maps raw x directly to conv outputs at within-window offset i, laid
    # out (pool-window p)-major / (channel h)-minor in lanes.  MaxPool(kernel=12,
    # stride=5) is then just an elementwise maximum over the 12 offsets (pure VPU):
    acc = jnp.dot(x, wpool_ref[0], preferred_element_type=jnp.float32)  # (bb, Lp*H) f32
    for i in range(1, POOL_K):
        acc = jnp.maximum(
            acc, jnp.dot(x, wpool_ref[i], preferred_element_type=jnp.float32))
    pooled = acc + cb_ref[...]          # conv bias is offset-independent, commutes with max

    # --- Linear -> ReLU -> Dropout(eval) -> Linear -> Softmax(dim=1) --------------
    # TODO(synk): nn.Dropout is stochastic/training-only; eval-mode identity here.
    y = jnp.dot(pooled.astype(compute_dtype), w1t_ref[...],
                preferred_element_type=jnp.float32) + b1_ref[...]
    y = jnp.maximum(y, 0.0)
    z = jnp.dot(y.astype(compute_dtype), w2t_ref[...],
                preferred_element_type=jnp.float32) + b2_ref[...]       # (bb, OUT_PAD)
    # Padded logit columns carry bias -1e30 -> exp() == 0, so softmax over the
    # 128-lane slab equals softmax over the real OUT classes.
    z = z - jnp.max(z, axis=1, keepdims=True)
    e = jnp.exp(z)
    inv = pl.reciprocal(jnp.sum(e, axis=1, keepdims=True), approx=True)  # EUP vrcp
    o_ref[...] = (e * inv).astype(o_ref.dtype)                           # lane-dense store


def cnn_forward(x, conv_w, conv_b, w1, b1, w2, b2, *,
                b_block=None, compute_dtype=jnp.bfloat16):
    """x: (B, L, Cin) — the PyTorch forward's input *before* its internal permute.
    conv_w: (H, Cin, 12); w1: (2H, H*Lp); w2: (OUT, 2H).  Returns (B, OUT) f32."""
    B, L, Cin = x.shape
    H, _, K = conv_w.shape
    assert K == CONV_K
    Lc = L - K + 1
    Lp = (Lc - POOL_K) // POOL_S + 1
    D1 = w1.shape[0]                   # 2H
    OUT = w2.shape[0]
    assert OUT <= OUT_PAD
    F = L * Cin                        # streamed width per sample (raw x, no im2col)
    PH = Lp * H

    # ---- host-side weight prep (tiny, one-time XLA work) -------------------------
    # wcol[k*Cin + c, h] = conv_w[h, c, k]
    wcol = jnp.transpose(conv_w, (2, 1, 0)).reshape(K * Cin, H)
    # cols[l]: (L*Cin, H) matmul producing conv output position l from flat raw x.
    cols = [jnp.pad(wcol, ((l * Cin, (L - K - l) * Cin), (0, 0))) for l in range(Lc)]
    # wpool[i]: conv positions {p*POOL_S + i} for every pool window p (p-major lanes).
    wpool = jnp.stack(
        [jnp.concatenate([cols[p * POOL_S + i] for p in range(Lp)], axis=1)
         for i in range(POOL_K)], axis=0)                          # (POOL_K, L*Cin, Lp*H)
    cb_pool = jnp.tile(conv_b, Lp).reshape(1, PH).astype(jnp.float32)
    # torch.flatten of (B, H, Lp) is h-major; our pooled lanes are p-major, so permute
    # w1's columns once host-side: w1t[p*H + h, :] = w1.T[h*Lp + p, :]
    w1t = jnp.transpose(w1).reshape(H, Lp, D1).transpose(1, 0, 2).reshape(PH, D1)
    # Lane-dense logits: zero-pad w2^T to 128 columns; pad biases to -1e30.
    w2t = jnp.concatenate(
        [jnp.transpose(w2), jnp.zeros((D1, OUT_PAD - OUT), w2.dtype)], axis=1)
    b2p = jnp.concatenate(
        [b2.astype(jnp.float32),
         jnp.full((OUT_PAD - OUT,), NEG_BIG, jnp.float32)]).reshape(1, OUT_PAD)

    # ---- batch blocking ------------------------------------------------------------
    # Default: <=256 samples/step (well under VMEM on v5e/v6e/v7x: per-step working set
    # is ~0.5 MiB incl. double buffers + resident weights), and >=2 grid steps when
    # possible so the DMA pipeline and both v7x TensorCores get work.
    if b_block is None:
        b_block = min(256, _round_up(B, 8))
        while b_block >= 16 and _cdiv(B, b_block) < 2:
            b_block //= 2
    b_block = _round_up(b_block, 8)
    B_pad = _round_up(B, b_block)
    grid = (B_pad // b_block,)

    x_flat = x.reshape(B, F)
    if B_pad != B:
        x_flat = jnp.pad(x_flat, ((0, B_pad - B), (0, 0)))
    x_flat = x_flat.astype(compute_dtype)        # bf16 halves the dominant HBM stream
    item = jnp.dtype(compute_dtype).itemsize

    resident2 = lambda b: (0, 0)                 # weights: same block every step -> stay in VMEM
    resident3 = lambda b: (0, 0, 0)
    kernel = functools.partial(_cnn_kernel, compute_dtype=compute_dtype)

    cost = pl.CostEstimate(
        flops=2 * B_pad * (POOL_K * F * PH + PH * D1 + D1 * OUT_PAD),
        transcendentals=B_pad * (OUT_PAD + 1),
        bytes_accessed=(B_pad * F * item + B_pad * OUT_PAD * 4
                        + (POOL_K * F * PH + PH * D1 + D1 * OUT_PAD) * item),
    )

    out = pl.pallas_call(
        kernel,
        out_shape=jax.ShapeDtypeStruct((B_pad, OUT_PAD), jnp.float32),
        grid=grid,
        in_specs=[
            pl.BlockSpec((b_block, F), lambda b: (b, 0)),      # raw activations, streamed over B
            pl.BlockSpec((POOL_K, F, PH), resident3),          # fused conv+pool weight
            pl.BlockSpec((1, PH), resident2),                  # conv bias (pool layout), f32
            pl.BlockSpec((PH, D1), resident2),                 # w1^T (columns permuted)
            pl.BlockSpec((1, D1), resident2),                  # b1, f32
            pl.BlockSpec((D1, OUT_PAD), resident2),            # w2^T zero-padded to 128
            pl.BlockSpec((1, OUT_PAD), resident2),             # b2 padded with -1e30
        ],
        out_specs=pl.BlockSpec((b_block, OUT_PAD), lambda b: (b, 0)),
        compiler_params=pltpu.CompilerParams(
            dimension_semantics=("parallel",)),                # megacore / v7x 2-TC
        cost_estimate=cost,
    )(x_flat, wpool.astype(compute_dtype), cb_pool,
      w1t.astype(compute_dtype), b1.reshape(1, D1).astype(jnp.float32),
      w2t.astype(compute_dtype), b2p)

    return out[:B, :OUT]


def cnn_reference(x, conv_w, conv_b, w1, b1, w2, b2):
    """Pure-JAX reference mirroring the PyTorch forward (eval mode)."""
    B, L, Cin = x.shape
    H = conv_w.shape[0]
    Lc = L - CONV_K + 1
    Lp = (Lc - POOL_K) // POOL_S + 1
    xc = jnp.transpose(x, (0, 2, 1))                               # (B, Cin, L)
    conv = jnp.zeros((B, H, Lc), jnp.float32)
    for k in range(CONV_K):
        conv = conv + jnp.einsum("bcl,hc->bhl", xc[:, :, k:k + Lc], conv_w[:, :, k])
    conv = conv + conv_b[None, :, None]
    pooled = jnp.stack(
        [jnp.max(conv[:, :, p * POOL_S: p * POOL_S + POOL_K], axis=-1) for p in range(Lp)],
        axis=-1,
    )                                                              # (B, H, Lp)
    flat = pooled.reshape(B, H * Lp)                               # torch.flatten (h-major)
    y = jnp.maximum(flat @ w1.T + b1, 0.0)
    z = y @ w2.T + b2
    return jax.nn.softmax(z, axis=1)


if __name__ == "__main__":
    key = jax.random.PRNGKey(0)
    B, L, Cin = 32, 33, 4             # batch, sequence_length, input_size
    H, OUT = 16, 3                    # hidden_size, output_size
    Lc = L - CONV_K + 1               # 22
    Lp = (Lc - POOL_K) // POOL_S + 1  # 3
    flat_dim = H * Lp                 # calc_maxpool_output(hidden, seq_len)

    ks = jax.random.split(key, 7)
    conv_w = jax.random.normal(ks[0], (H, Cin, CONV_K), jnp.float32) * 0.1
    conv_b = jax.random.normal(ks[1], (H,), jnp.float32) * 0.1
    w1 = jax.random.normal(ks[2], (2 * H, flat_dim), jnp.float32) * 0.1
    b1 = jax.random.normal(ks[3], (2 * H,), jnp.float32) * 0.1
    w2 = jax.random.normal(ks[4], (OUT, 2 * H), jnp.float32) * 0.1
    b2 = jax.random.normal(ks[5], (OUT,), jnp.float32) * 0.1
    x = jax.random.normal(ks[6], (B, L, Cin), jnp.float32)

    ref = cnn_reference(x, conv_w, conv_b, w1, b1, w2, b2)

    # f32 streamed path: structural parity check (only the approx EUP reciprocal differs).
    out32 = jax.block_until_ready(
        cnn_forward(x, conv_w, conv_b, w1, b1, w2, b2,
                    compute_dtype=jnp.float32, b_block=8))          # grid=(4,)
    assert out32.shape == (B, OUT)
    assert jnp.allclose(out32, ref, atol=1e-2, rtol=1e-2)
    assert jnp.allclose(jnp.sum(out32, axis=1), 1.0, atol=1e-2)

    # bf16 streamed path (recommended: halves HBM traffic, native MXU path on v6e/v7x);
    # tolerance relaxed for expected bf16 drift.
    out16 = jax.block_until_ready(
        cnn_forward(x, conv_w, conv_b, w1, b1, w2, b2,
                    compute_dtype=jnp.bfloat16, b_block=8))
    assert out16.shape == (B, OUT)
    assert jnp.allclose(out16, ref, atol=5e-2, rtol=5e-2)

    print("KERNEL_OK")
</pallas_src>

<mosaic_0001>
module attributes {stable_mosaic.version = 11 : i64} {
  func.func @_cnn_kernel(%arg0: i32, %arg1: memref<8x132xf32, #tpu.memory_space<vmem>>, %arg2: memref<12x132x48xf32, #tpu.memory_space<vmem>>, %arg3: memref<1x48xf32, #tpu.memory_space<vmem>>, %arg4: memref<48x32xf32, #tpu.memory_space<vmem>>, %arg5: memref<1x32xf32, #tpu.memory_space<vmem>>, %arg6: memref<32x128xf32, #tpu.memory_space<vmem>>, %arg7: memref<1x128xf32, #tpu.memory_space<vmem>>, %arg8: memref<8x128xf32, #tpu.memory_space<vmem>>) attributes {dimension_semantics = [#tpu.dimension_semantics<parallel>], iteration_bounds = array<i64: 4>, scalar_prefetch = 0 : i64, scratch_operands = 0 : i64, tpu.core_type = #tpu.core_type<tc>, window_params = [{transform_indices = @transform_0, window_bounds = array<i64: 8, 132>}, {pipeline_mode = #tpu.pipeline_mode<synchronous>, transform_indices = @transform_1, window_bounds = array<i64: 12, 132, 48>}, {pipeline_mode = #tpu.pipeline_mode<synchronous>, transform_indices = @transform_2, window_bounds = array<i64: 1, 48>}, {pipeline_mode = #tpu.pipeline_mode<synchronous>, transform_indices = @transform_3, window_bounds = array<i64: 48, 32>}, {pipeline_mode = #tpu.pipeline_mode<synchronous>, transform_indices = @transform_4, window_bounds = array<i64: 1, 32>}, {pipeline_mode = #tpu.pipeline_mode<synchronous>, transform_indices = @transform_5, window_bounds = array<i64: 32, 128>}, {pipeline_mode = #tpu.pipeline_mode<synchronous>, transform_indices = @transform_6, window_bounds = array<i64: 1, 128>}, {transform_indices = @transform_7, window_bounds = array<i64: 8, 128>}]} {
    %c0 = arith.constant 0 : index
    %c0_0 = arith.constant 0 : index
    %0 = vector.load %arg1[%c0, %c0_0] : memref<8x132xf32, #tpu.memory_space<vmem>>, vector<8x132xf32>
    %c0_1 = arith.constant 0 : index
    %c0_2 = arith.constant 0 : index
    %c0_3 = arith.constant 0 : index
    %1 = vector.load %arg2[%c0_1, %c0_2, %c0_3] : memref<12x132x48xf32, #tpu.memory_space<vmem>>, vector<1x132x48xf32>
    %2 = vector.shape_cast %1 : vector<1x132x48xf32> to vector<132x48xf32>
    %cst = arith.constant dense<0.000000e+00> : vector<8x48xf32>
    %3 = tpu.matmul %0, %2, %cst {dimension_numbers = #tpu.dot_dimension_numbers<[1], [0], [0], [1], [0, 0, 1, 1], [], []>} : vector<8x132xf32>, vector<132x48xf32>, vector<8x48xf32> -> vector<8x48xf32>
    %c1 = arith.constant 1 : index
    %c0_4 = arith.constant 0 : index
    %c0_5 = arith.constant 0 : index
    %4 = vector.load %arg2[%c1, %c0_4, %c0_5] : memref<12x132x48xf32, #tpu.memory_space<vmem>>, vector<1x132x48xf32>
    %5 = vector.shape_cast %4 : vector<1x132x48xf32> to vector<132x48xf32>
    %cst_6 = arith.constant dense<0.000000e+00> : vector<8x48xf32>
    %6 = tpu.matmul %0, %5, %cst_6 {dimension_numbers = #tpu.dot_dimension_numbers<[1], [0], [0], [1], [0, 0, 1, 1], [], []>} : vector<8x132xf32>, vector<132x48xf32>, vector<8x48xf32> -> vector<8x48xf32>
    %7 = arith.maximumf %3, %6 : vector<8x48xf32>
    %c2 = arith.constant 2 : index
    %c0_7 = arith.constant 0 : index
    %c0_8 = arith.constant 0 : index
    %8 = vector.load %arg2[%c2, %c0_7, %c0_8] : memref<12x132x48xf32, #tpu.memory_space<vmem>>, vector<1x132x48xf32>
    %9 = vector.shape_cast %8 : vector<1x132x48xf32> to vector<132x48xf32>
    %cst_9 = arith.constant dense<0.000000e+00> : vector<8x48xf32>
    %10 = tpu.matmul %0, %9, %cst_9 {dimension_numbers = #tpu.dot_dimension_numbers<[1], [0], [0], [1], [0, 0, 1, 1], [], []>} : vector<8x132xf32>, vector<132x48xf32>, vector<8x48xf32> -> vector<8x48xf32>
    %11 = arith.maximumf %7, %10 : vector<8x48xf32>
    %c3 = arith.constant 3 : index
    %c0_10 = arith.constant 0 : index
    %c0_11 = arith.constant 0 : index
    %12 = vector.load %arg2[%c3, %c0_10, %c0_11] : memref<12x132x48xf32, #tpu.memory_space<vmem>>, vector<1x132x48xf32>
    %13 = vector.shape_cast %12 : vector<1x132x48xf32> to vector<132x48xf32>
    %cst_12 = arith.constant dense<0.000000e+00> : vector<8x48xf32>
    %14 = tpu.matmul %0, %13, %cst_12 {dimension_numbers = #tpu.dot_dimension_numbers<[1], [0], [0], [1], [0, 0, 1, 1], [], []>} : vector<8x132xf32>, vector<132x48xf32>, vector<8x48xf32> -> vector<8x48xf32>
    %15 = arith.maximumf %11, %14 : vector<8x48xf32>
    %c4 = arith.constant 4 : index
    %c0_13 = arith.constant 0 : index
    %c0_14 = arith.constant 0 : index
    %16 = vector.load %arg2[%c4, %c0_13, %c0_14] : memref<12x132x48xf32, #tpu.memory_space<vmem>>, vector<1x132x48xf32>
    %17 = vector.shape_cast %16 : vector<1x132x48xf32> to vector<132x48xf32>
    %cst_15 = arith.constant dense<0.000000e+00> : vector<8x48xf32>
    %18 = tpu.matmul %0, %17, %cst_15 {dimension_numbers = #tpu.dot_dimension_numbers<[1], [0], [0], [1], [0, 0, 1, 1], [], []>} : vector<8x132xf32>, vector<132x48xf32>, vector<8x48xf32> -> vector<8x48xf32>
    %19 = arith.maximumf %15, %18 : vector<8x48xf32>
    %c5 = arith.constant 5 : index
    %c0_16 = arith.constant 0 : index
    %c0_17 = arith.constant 0 : index
    %20 = vector.load %arg2[%c5, %c0_16, %c0_17] : memref<12x132x48xf32, #tpu.memory_space<vmem>>, vector<1x132x48xf32>
    %21 = vector.shape_cast %20 : vector<1x132x48xf32> to vector<132x48xf32>
    %cst_18 = arith.constant dense<0.000000e+00> : vector<8x48xf32>
    %22 = tpu.matmul %0, %21, %cst_18 {dimension_numbers = #tpu.dot_dimension_numbers<[1], [0], [0], [1], [0, 0, 1, 1], [], []>} : vector<8x132xf32>, vector<132x48xf32>, vector<8x48xf32> -> vector<8x48xf32>
    %23 = arith.maximumf %19, %22 : vector<8x48xf32>
    %c6 = arith.constant 6 : index
    %c0_19 = arith.constant 0 : index
    %c0_20 = arith.constant 0 : index
    %24 = vector.load %arg2[%c6, %c0_19, %c0_20] : memref<12x132x48xf32, #tpu.memory_space<vmem>>, vector<1x132x48xf32>
    %25 = vector.shape_cast %24 : vector<1x132x48xf32> to vector<132x48xf32>
    %cst_21 = arith.constant dense<0.000000e+00> : vector<8x48xf32>
    %26 = tpu.matmul %0, %25, %cst_21 {dimension_numbers = #tpu.dot_dimension_numbers<[1], [0], [0], [1], [0, 0, 1, 1], [], []>} : vector<8x132xf32>, vector<132x48xf32>, vector<8x48xf32> -> vector<8x48xf32>
    %27 = arith.maximumf %23, %26 : vector<8x48xf32>
    %c7 = arith.constant 7 : index
    %c0_22 = arith.constant 0 : index
    %c0_23 = arith.constant 0 : index
    %28 = vector.load %arg2[%c7, %c0_22, %c0_23] : memref<12x132x48xf32, #tpu.memory_space<vmem>>, vector<1x132x48xf32>
    %29 = vector.shape_cast %28 : vector<1x132x48xf32> to vector<132x48xf32>
    %cst_24 = arith.constant dense<0.000000e+00> : vector<8x48xf32>
    %30 = tpu.matmul %0, %29, %cst_24 {dimension_numbers = #tpu.dot_dimension_numbers<[1], [0], [0], [1], [0, 0, 1, 1], [], []>} : vector<8x132xf32>, vector<132x48xf32>, vector<8x48xf32> -> vector<8x48xf32>
    %31 = arith.maximumf %27, %30 : vector<8x48xf32>
    %c8 = arith.constant 8 : index
    %c0_25 = arith.constant 0 : index
    %c0_26 = arith.constant 0 : index
    %32 = vector.load %arg2[%c8, %c0_25, %c0_26] : memref<12x132x48xf32, #tpu.memory_space<vmem>>, vector<1x132x48xf32>
    %33 = vector.shape_cast %32 : vector<1x132x48xf32> to vector<132x48xf32>
    %cst_27 = arith.constant dense<0.000000e+00> : vector<8x48xf32>
    %34 = tpu.matmul %0, %33, %cst_27 {dimension_numbers = #tpu.dot_dimension_numbers<[1], [0], [0], [1], [0, 0, 1, 1], [], []>} : vector<8x132xf32>, vector<132x48xf32>, vector<8x48xf32> -> vector<8x48xf32>
    %35 = arith.maximumf %31, %34 : vector<8x48xf32>
    %c9 = arith.constant 9 : index
    %c0_28 = arith.constant 0 : index
    %c0_29 = arith.constant 0 : index
    %36 = vector.load %arg2[%c9, %c0_28, %c0_29] : memref<12x132x48xf32, #tpu.memory_space<vmem>>, vector<1x132x48xf32>
    %37 = vector.shape_cast %36 : vector<1x132x48xf32> to vector<132x48xf32>
    %cst_30 = arith.constant dense<0.000000e+00> : vector<8x48xf32>
    %38 = tpu.matmul %0, %37, %cst_30 {dimension_numbers = #tpu.dot_dimension_numbers<[1], [0], [0], [1], [0, 0, 1, 1], [], []>} : vector<8x132xf32>, vector<132x48xf32>, vector<8x48xf32> -> vector<8x48xf32>
    %39 = arith.maximumf %35, %38 : vector<8x48xf32>
    %c10 = arith.constant 10 : index
    %c0_31 = arith.constant 0 : index
    %c0_32 = arith.constant 0 : index
    %40 = vector.load %arg2[%c10, %c0_31, %c0_32] : memref<12x132x48xf32, #tpu.memory_space<vmem>>, vector<1x132x48xf32>
    %41 = vector.shape_cast %40 : vector<1x132x48xf32> to vector<132x48xf32>
    %cst_33 = arith.constant dense<0.000000e+00> : vector<8x48xf32>
    %42 = tpu.matmul %0, %41, %cst_33 {dimension_numbers = #tpu.dot_dimension_numbers<[1], [0], [0], [1], [0, 0, 1, 1], [], []>} : vector<8x132xf32>, vector<132x48xf32>, vector<8x48xf32> -> vector<8x48xf32>
    %43 = arith.maximumf %39, %42 : vector<8x48xf32>
    %c11 = arith.constant 11 : index
    %c0_34 = arith.constant 0 : index
    %c0_35 = arith.constant 0 : index
    %44 = vector.load %arg2[%c11, %c0_34, %c0_35] : memref<12x132x48xf32, #tpu.memory_space<vmem>>, vector<1x132x48xf32>
    %45 = vector.shape_cast %44 : vector<1x132x48xf32> to vector<132x48xf32>
    %cst_36 = arith.constant dense<0.000000e+00> : vector<8x48xf32>
    %46 = tpu.matmul %0, %45, %cst_36 {dimension_numbers = #tpu.dot_dimension_numbers<[1], [0], [0], [1], [0, 0, 1, 1], [], []>} : vector<8x132xf32>, vector<132x48xf32>, vector<8x48xf32> -> vector<8x48xf32>
    %47 = arith.maximumf %43, %46 : vector<8x48xf32>
    %c0_37 = arith.constant 0 : index
    %c0_38 = arith.constant 0 : index
    %48 = vector.load %arg3[%c0_37, %c0_38] : memref<1x48xf32, #tpu.memory_space<vmem>>, vector<1x48xf32>
    %49 = vector.broadcast %48 : vector<1x48xf32> to vector<8x48xf32>
    %50 = arith.addf %47, %49 : vector<8x48xf32>
    %c0_39 = arith.constant 0 : index
    %c0_40 = arith.constant 0 : index
    %51 = vector.load %arg4[%c0_39, %c0_40] : memref<48x32xf32, #tpu.memory_space<vmem>>, vector<48x32xf32>
    %cst_41 = arith.constant dense<0.000000e+00> : vector<8x32xf32>
    %52 = tpu.matmul %50, %51, %cst_41 {dimension_numbers = #tpu.dot_dimension_numbers<[1], [0], [0], [1], [0, 0, 1, 1], [], []>} : vector<8x48xf32>, vector<48x32xf32>, vector<8x32xf32> -> vector<8x32xf32>
    %c0_42 = arith.constant 0 : index
    %c0_43 = arith.constant 0 : index
    %53 = vector.load %arg5[%c0_42, %c0_43] : memref<1x32xf32, #tpu.memory_space<vmem>>, vector<1x32xf32>
    %54 = vector.broadcast %53 : vector<1x32xf32> to vector<8x32xf32>
    %55 = arith.addf %52, %54 : vector<8x32xf32>
    %cst_44 = arith.constant 0.000000e+00 : f32
    %56 = vector.broadcast %cst_44 : f32 to vector<8x32xf32>
    %57 = arith.maximumf %55, %56 : vector<8x32xf32>
    %c0_45 = arith.constant 0 : index
    %c0_46 = arith.constant 0 : index
    %58 = vector.load %arg6[%c0_45, %c0_46] : memref<32x128xf32, #tpu.memory_space<vmem>>, vector<32x128xf32>
    %cst_47 = arith.constant dense<0.000000e+00> : vector<8x128xf32>
    %59 = tpu.matmul %57, %58, %cst_47 {dimension_numbers = #tpu.dot_dimension_numbers<[1], [0], [0], [1], [0, 0, 1, 1], [], []>} : vector<8x32xf32>, vector<32x128xf32>, vector<8x128xf32> -> vector<8x128xf32>
    %c0_48 = arith.constant 0 : index
    %c0_49 = arith.constant 0 : index
    %60 = vector.load %arg7[%c0_48, %c0_49] : memref<1x128xf32, #tpu.memory_space<vmem>>, vector<1x128xf32>
    %61 = vector.broadcast %60 : vector<1x128xf32> to vector<8x128xf32>
    %62 = arith.addf %59, %61 : vector<8x128xf32>
    %cst_50 = arith.constant dense<0xFF800000> : vector<8xf32>
    %63 = vector.multi_reduction <maximumf>, %62, %cst_50 [1] : vector<8x128xf32> to vector<8xf32>
    %64 = vector.shape_cast %63 : vector<8xf32> to vector<8x1xf32>
    %65 = vector.broadcast %64 : vector<8x1xf32> to vector<8x128xf32>
    %66 = arith.subf %62, %65 : vector<8x128xf32>
    %67 = math.exp %66 : vector<8x128xf32>
    %cst_51 = arith.constant dense<0.000000e+00> : vector<8xf32>
    %68 = vector.multi_reduction <add>, %67, %cst_51 [1] : vector<8x128xf32> to vector<8xf32>
    %69 = vector.shape_cast %68 : vector<8xf32> to vector<8x1xf32>
    %70 = tpu.reciprocal %69 {approx = true} : vector<8x1xf32> -> vector<8x1xf32>
    %71 = vector.broadcast %70 : vector<8x1xf32> to vector<8x128xf32>
    %72 = arith.mulf %67, %71 : vector<8x128xf32>
    %c0_52 = arith.constant 0 : index
    %c0_53 = arith.constant 0 : index
    %73 = vector.load %arg8[%c0_52, %c0_53] : memref<8x128xf32, #tpu.memory_space<vmem>>, vector<8x128xf32>
    tpu.vector_store %arg8[%c0_52, %c0_53], %72 {strides = array<i32>} : memref<8x128xf32, #tpu.memory_space<vmem>>, vector<8x128xf32>,
    return
  }
  func.func @transform_0(%arg0: i32) -> (i32, i32) {
    %c0_i32 = arith.constant 0 : i32
    %c0_i32_0 = arith.constant 0 : i32
    return %arg0, %c0_i32 : i32, i32
  }
  func.func @transform_1(%arg0: i32) -> (i32, i32, i32) {
    %c0_i32 = arith.constant 0 : i32
    %c0_i32_0 = arith.constant 0 : i32
    %c0_i32_1 = arith.constant 0 : i32
    %c0_i32_2 = arith.constant 0 : i32
    return %c0_i32, %c0_i32_0, %c0_i32_1 : i32, i32, i32
  }
  func.func @transform_2(%arg0: i32) -> (i32, i32) {
    %c0_i32 = arith.constant 0 : i32
    %c0_i32_0 = arith.constant 0 : i32
    %c0_i32_1 = arith.constant 0 : i32
    return %c0_i32, %c0_i32_0 : i32, i32
  }
  func.func @transform_3(%arg0: i32) -> (i32, i32) {
    %c0_i32 = arith.constant 0 : i32
    %c0_i32_0 = arith.constant 0 : i32
    %c0_i32_1 = arith.constant 0 : i32
    return %c0_i32, %c0_i32_0 : i32, i32
  }
  func.func @transform_4(%arg0: i32) -> (i32, i32) {
    %c0_i32 = arith.constant 0 : i32
    %c0_i32_0 = arith.constant 0 : i32
    %c0_i32_1 = arith.constant 0 : i32
    return %c0_i32, %c0_i32_0 : i32, i32
  }
  func.func @transform_5(%arg0: i32) -> (i32, i32) {
    %c0_i32 = arith.constant 0 : i32
    %c0_i32_0 = arith.constant 0 : i32
    %c0_i32_1 = arith.constant 0 : i32
    return %c0_i32, %c0_i32_0 : i32, i32
  }
  func.func @transform_6(%arg0: i32) -> (i32, i32) {
    %c0_i32 = arith.constant 0 : i32
    %c0_i32_0 = arith.constant 0 : i32
    %c0_i32_1 = arith.constant 0 : i32
    return %c0_i32, %c0_i32_0 : i32, i32
  }
  func.func @transform_7(%arg0: i32) -> (i32, i32) {
    %c0_i32 = arith.constant 0 : i32
    %c0_i32_0 = arith.constant 0 : i32
    return %arg0, %c0_i32 : i32, i32
  }
}

</mosaic_0001>

<llo_original>
// kernel: tpu_custom_call.1
$region0: #{tpu_custom_call.1}
  #allocation0 [shape = 'u32[]', space=smem, size = 0x4, offset = 0x4, fixed_abs, tag = 'smem constant byte address 0x4 - core index']
  #allocation1 [shape = 'u32[72,128]{1,0:T(1,128)}', space=vmem, size = 0x9000, scoped, tag = 'internal scratch']
  %s0 = inlined_call_operand.vmem [shape: f32[32,132], index: 0, kind: input, shape index: {}]
  %s1 = inlined_call_operand.vmem [shape: f32[12,132,48], index: 1, kind: input, shape index: {}]
  %s2 = inlined_call_operand.vmem [shape: f32[1,48], index: 2, kind: input, shape index: {}]
  %s3 = inlined_call_operand.vmem [shape: f32[48,32], index: 3, kind: input, shape index: {}]
  %s4 = inlined_call_operand.vmem [shape: f32[1,32], index: 4, kind: input, shape index: {}]
  %s5 = inlined_call_operand.vmem [shape: f32[32,128], index: 5, kind: input, shape index: {}]
  %s6 = inlined_call_operand.vmem [shape: f32[1,128], index: 6, kind: input, shape index: {}]
  %s7 = inlined_call_operand.hbm [shape: f32[32,128], index: 7, kind: output, shape index: {}]
  %s8 = sld [smem:[#allocation0]]
  $region61: #{tpu_custom_call.1} parent=0
    _
  %s10 = ssub.s32 1, %s8
  %s11 = scalar_select 0, %s10, %s8
  $region1: #{tpu_custom_call.1} parent=0
    #allocation2 [shape = 'u8[8192]{0}', space=vmem, size = 0x2000, scoped, tag = 'output window, operand 0']
    #allocation3 [shape = 's32[2]{0}', space=sflag, size = 0x8, scoped, tag = 'scoped memory for tpu_custom_call.1']
    %12 = vsyncpa [#allocation3], 0
    %s13 = scalar_lea.sflag [#allocation3], 1
    %14 = vsyncpa %s13, 0
    loop: start=0, step=1, limit=6
    $region2: #{tpu_custom_call.1} parent=1 // loop_pre_header
      _
    $region3: #{tpu_custom_call.1} parent=1 // loop_header
      %s16 = sphi 0, %s20
      %p17 = scmp.ge.s32.totalorder %s16, 6
      %s26 = sphi 0, %s28
      %s29 = sphi 0, %s26
      %s30 = sphi 0, %s29
      %s46 = sphi 0, %s30
      %s50 = sphi 0, %s50
      %s52 = sphi 0, %s50
      %s53 = sphi 0, %s52
      %s67 = sphi 0, %s53
      %s71 = sphi 0, %s71
      %s73 = sphi 0, %s71
      %s74 = sphi 0, %s73
      %s88 = sphi 0, %s74
      %s92 = sphi 0, %s92
      %s94 = sphi 0, %s92
      %s95 = sphi 0, %s94
      %s109 = sphi 0, %s95
      %s113 = sphi 0, %s113
      %s115 = sphi 0, %s113
      %s116 = sphi 0, %s115
      %s130 = sphi 0, %s116
      %s134 = sphi 0, %s134
      %s136 = sphi 0, %s134
      %s137 = sphi 0, %s136
      %s151 = sphi 0, %s137
      %s155 = sphi 0, %s155
      %s157 = sphi 0, %s155
      %s158 = sphi 0, %s157
      %s172 = sphi 0, %s158
      %s178 = sphi 0, %s180
      %s181 = sphi 0, %s178
      %s182 = sphi 0, %s181
      %s198 = sphi 0, %s182
    $region4: #{tpu_custom_call.1} parent=1 // loop_header_branch
      %19 = sbr.rel (%p17) target = $region8
    $region5: #{tpu_custom_call.1} parent=1 // loop_body
      %s21 = ssub.s32 %s16, 1
      %s22 = ssub.s32 %s16, 2
      %s23 = sadd.s32 %s16, 1
      %s24 = ssub.s32 %s16, %s23
      %p25 = scmp.eq.s32.totalorder %s24, 0
      %s27 = sadd.s32 %s26, 1
      %s28 = scalar_select %p25, %s26, %s27
      %p31 = pneg %p25
      %p32 = scmp.eq.s32.totalorder %s16, 3
      %p33 = por %p31, %p32
      %p34 = scmp.ne.s32.totalorder %s26, %s29
      %p35 = scmp.eq.s32.totalorder %s16, 0
      %p36 = por %p34, %p35
      %p37 = scmp.ne.s32.totalorder %s26, %s29
      %p38 = scmp.eq.s32.totalorder %s21, 3
      %p39 = por %p37, %p38
      %p40 = scmp.ne.s32.totalorder %s29, %s30
      %p41 = scmp.eq.s32.totalorder %s21, 0
      %p42 = por %p40, %p41
      %p43 = scmp.ne.s32.totalorder %s29, %s30
      %p44 = scmp.eq.s32.totalorder %s22, 3
      %p45 = por %p43, %p44
      %p47 = scmp.ne.s32.totalorder %s30, %s46
      %p48 = scmp.eq.s32.totalorder %s22, 0
      %p49 = por %p47, %p48
      %s51 = sadd.s32 %s50, 1
      %p54 = scmp.eq.s32.totalorder %s16, 3
      %p55 = scmp.ne.s32.totalorder %s50, %s52
      %p56 = scmp.eq.s32.totalorder %s16, 0
      %p57 = por %p55, %p56
      %p58 = scmp.ne.s32.totalorder %s50, %s52
      %p59 = scmp.eq.s32.totalorder %s21, 3
      %p60 = por %p58, %p59
      %p61 = scmp.ne.s32.totalorder %s52, %s53
      %p62 = scmp.eq.s32.totalorder %s21, 0
      %p63 = por %p61, %p62
      %p64 = scmp.ne.s32.totalorder %s52, %s53
      %p65 = scmp.eq.s32.totalorder %s22, 3
      %p66 = por %p64, %p65
      %p68 = scmp.ne.s32.totalorder %s53, %s67
      %p69 = scmp.eq.s32.totalorder %s22, 0
      %p70 = por %p68, %p69
      %s72 = sadd.s32 %s71, 1
      %p75 = scmp.eq.s32.totalorder %s16, 3
      %p76 = scmp.ne.s32.totalorder %s71, %s73
      %p77 = scmp.eq.s32.totalorder %s16, 0
      %p78 = por %p76, %p77
      %p79 = scmp.ne.s32.totalorder %s71, %s73
      %p80 = scmp.eq.s32.totalorder %s21, 3
      %p81 = por %p79, %p80
      %p82 = scmp.ne.s32.totalorder %s73, %s74
      %p83 = scmp.eq.s32.totalorder %s21, 0
      %p84 = por %p82, %p83
      %p85 = scmp.ne.s32.totalorder %s73, %s74
      %p86 = scmp.eq.s32.totalorder %s22, 3
      %p87 = por %p85, %p86
      %p89 = scmp.ne.s32.totalorder %s74, %s88
      %p90 = scmp.eq.s32.totalorder %s22, 0
      %p91 = por %p89, %p90
      %s93 = sadd.s32 %s92, 1
      %p96 = scmp.eq.s32.totalorder %s16, 3
      %p97 = scmp.ne.s32.totalorder %s92, %s94
      %p98 = scmp.eq.s32.totalorder %s16, 0
      %p99 = por %p97, %p98
      %p100 = scmp.ne.s32.totalorder %s92, %s94
      %p101 = scmp.eq.s32.totalorder %s21, 3
      %p102 = por %p100, %p101
      %p103 = scmp.ne.s32.totalorder %s94, %s95
      %p104 = scmp.eq.s32.totalorder %s21, 0
      %p105 = por %p103, %p104
      %p106 = scmp.ne.s32.totalorder %s94, %s95
      %p107 = scmp.eq.s32.totalorder %s22, 3
      %p108 = por %p106, %p107
      %p110 = scmp.ne.s32.totalorder %s95, %s109
      %p111 = scmp.eq.s32.totalorder %s22, 0
      %p112 = por %p110, %p111
      %s114 = sadd.s32 %s113, 1
      %p117 = scmp.eq.s32.totalorder %s16, 3
      %p118 = scmp.ne.s32.totalorder %s113, %s115
      %p119 = scmp.eq.s32.totalorder %s16, 0
      %p120 = por %p118, %p119
      %p121 = scmp.ne.s32.totalorder %s113, %s115
      %p122 = scmp.eq.s32.totalorder %s21, 3
      %p123 = por %p121, %p122
      %p124 = scmp.ne.s32.totalorder %s115, %s116
      %p125 = scmp.eq.s32.totalorder %s21, 0
      %p126 = por %p124, %p125
      %p127 = scmp.ne.s32.totalorder %s115, %s116
      %p128 = scmp.eq.s32.totalorder %s22, 3
      %p129 = por %p127, %p128
      %p131 = scmp.ne.s32.totalorder %s116, %s130
      %p132 = scmp.eq.s32.totalorder %s22, 0
      %p133 = por %p131, %p132
      %s135 = sadd.s32 %s134, 1
      %p138 = scmp.eq.s32.totalorder %s16, 3
      %p139 = scmp.ne.s32.totalorder %s134, %s136
      %p140 = scmp.eq.s32.totalorder %s16, 0
      %p141 = por %p139, %p140
      %p142 = scmp.ne.s32.totalorder %s134, %s136
      %p143 = scmp.eq.s32.totalorder %s21, 3
      %p144 = por %p142, %p143
      %p145 = scmp.ne.s32.totalorder %s136, %s137
      %p146 = scmp.eq.s32.totalorder %s21, 0
      %p147 = por %p145, %p146
      %p148 = scmp.ne.s32.totalorder %s136, %s137
      %p149 = scmp.eq.s32.totalorder %s22, 3
      %p150 = por %p148, %p149
      %p152 = scmp.ne.s32.totalorder %s137, %s151
      %p153 = scmp.eq.s32.totalorder %s22, 0
      %p154 = por %p152, %p153
      %s156 = sadd.s32 %s155, 1
      %p159 = scmp.eq.s32.totalorder %s16, 3
      %p160 = scmp.ne.s32.totalorder %s155, %s157
      %p161 = scmp.eq.s32.totalorder %s16, 0
      %p162 = por %p160, %p161
      %p163 = scmp.ne.s32.totalorder %s155, %s157
      %p164 = scmp.eq.s32.totalorder %s21, 3
      %p165 = por %p163, %p164
      %p166 = scmp.ne.s32.totalorder %s157, %s158
      %p167 = scmp.eq.s32.totalorder %s21, 0
      %p168 = por %p166, %p167
      %p169 = scmp.ne.s32.totalorder %s157, %s158
      %p170 = scmp.eq.s32.totalorder %s22, 3
      %p171 = por %p169, %p170
      %p173 = scmp.ne.s32.totalorder %s158, %s172
      %p174 = scmp.eq.s32.totalorder %s22, 0
      %p175 = por %p173, %p174
      %s176 = ssub.s32 %s16, %s23
      %p177 = scmp.eq.s32.totalorder %s176, 0
      %s179 = sadd.s32 %s178, 1
      %s180 = scalar_select %p177, %s178, %s179
      %p183 = pneg %p177
      %p184 = scmp.eq.s32.totalorder %s16, 3
      %p185 = por %p183, %p184
      %p186 = scmp.ne.s32.totalorder %s178, %s181
      %p187 = scmp.eq.s32.totalorder %s16, 0
      %p188 = por %p186, %p187
      %p189 = scmp.ne.s32.totalorder %s178, %s181
      %p190 = scmp.eq.s32.totalorder %s21, 3
      %p191 = por %p189, %p190
      %p192 = scmp.ne.s32.totalorder %s181, %s182
      %p193 = scmp.eq.s32.totalorder %s21, 0
      %p194 = por %p192, %p193
      %p195 = scmp.ne.s32.totalorder %s181, %s182
      %p196 = scmp.eq.s32.totalorder %s22, 3
      %p197 = por %p195, %p196
      %p199 = scmp.ne.s32.totalorder %s182, %s198
      %p200 = scmp.eq.s32.totalorder %s22, 0
      %p201 = por %p199, %p200
      %p202 = scmp.le.s32.totalorder 1, %s16
      %p203 = scmp.lt.s32.totalorder %s16, 5
      %p204 = pnand %p202, %p203
      %p205 = pneg %p204
      // Predicated region
      $region9: #{tpu_custom_call.1} parent=5 // pred_check
        _
      $region10: #{tpu_custom_call.1} parent=5 // pred_check_branch
        %207 = sbr.rel (%p204) target = $region12
      $region11: #{tpu_custom_call.1} parent=5 // pred_region
        %s208 = ssub.s32 %s16, 1
        // Predicated region
        $region13: #{tpu_custom_call.1} parent=11 // pred_check
          %p209 = pneg %p63
        $region14: #{tpu_custom_call.1} parent=11 // pred_check_branch
          %211 = sbr.rel (%p209) target = $region16
        $region15: #{tpu_custom_call.1} parent=11 // pred_region
          _
        $region16: #{tpu_custom_call.1} parent=11 // pred_fallthru
          _
        // Predicated region
        $region17: #{tpu_custom_call.1} parent=11 // pred_check
          %p212 = pneg %p84
        $region18: #{tpu_custom_call.1} parent=11 // pred_check_branch
          %214 = sbr.rel (%p212) target = $region20
        $region19: #{tpu_custom_call.1} parent=11 // pred_region
          _
        $region20: #{tpu_custom_call.1} parent=11 // pred_fallthru
          _
        // Predicated region
        $region21: #{tpu_custom_call.1} parent=11 // pred_check
          %p215 = pneg %p105
        $region22: #{tpu_custom_call.1} parent=11 // pred_check_branch
          %217 = sbr.rel (%p215) target = $region24
        $region23: #{tpu_custom_call.1} parent=11 // pred_region
          _
        $region24: #{tpu_custom_call.1} parent=11 // pred_fallthru
          _
        // Predicated region
        $region25: #{tpu_custom_call.1} parent=11 // pred_check
          %p218 = pneg %p126
        $region26: #{tpu_custom_call.1} parent=11 // pred_check_branch
          %220 = sbr.rel (%p218) target = $region28
        $region27: #{tpu_custom_call.1} parent=11 // pred_region
          _
        $region28: #{tpu_custom_call.1} parent=11 // pred_fallthru
          _
        // Predicated region
        $region29: #{tpu_custom_call.1} parent=11 // pred_check
          %p221 = pneg %p147
        $region30: #{tpu_custom_call.1} parent=11 // pred_check_branch
          %223 = sbr.rel (%p221) target = $region32
        $region31: #{tpu_custom_call.1} parent=11 // pred_region
          _
        $region32: #{tpu_custom_call.1} parent=11 // pred_fallthru
          _
        // Predicated region
        $region33: #{tpu_custom_call.1} parent=11 // pred_check
          %p224 = pneg %p168
        $region34: #{tpu_custom_call.1} parent=11 // pred_check_branch
          %226 = sbr.rel (%p224) target = $region36
        $region35: #{tpu_custom_call.1} parent=11 // pred_region
          _
        $region36: #{tpu_custom_call.1} parent=11 // pred_fallthru
          _
      $region12: #{tpu_custom_call.1} parent=5 // pred_fallthru
        _
      %p227 = scmp.lt.s32.totalorder %s16, 4
      // Predicated region
      $region37: #{tpu_custom_call.1} parent=5 // pred_check
        %p228 = pneg %p227
      $region38: #{tpu_custom_call.1} parent=5 // pred_check_branch
        %230 = sbr.rel (%p228) target = $region40
      $region39: #{tpu_custom_call.1} parent=5 // pred_region
        // Predicated region
        $region41: #{tpu_custom_call.1} parent=39 // pred_check
          %p231 = pneg %p36
        $region42: #{tpu_custom_call.1} parent=39 // pred_check_branch
          %233 = sbr.rel (%p231) target = $region44
        $region43: #{tpu_custom_call.1} parent=39 // pred_region
          %p234 = scmp.lt.s32.totalorder %s16, 3
          %s235 = scalar_select %p234, %s16, 3
          %s236 = smul.addr %s235, 2
          %s237 = smul.addr %s236, 8
          %s238 = scalar_lea.vmem %s0, %s237
        $region44: #{tpu_custom_call.1} parent=39 // pred_fallthru
          _
      $region40: #{tpu_custom_call.1} parent=5 // pred_fallthru
        _
      %p239 = scmp.le.s32.totalorder 1, %s16
      %p240 = scmp.lt.s32.totalorder %s16, 5
      %p241 = pnand %p239, %p240
      %p242 = pneg %p241
      // Predicated region
      $region45: #{tpu_custom_call.1} parent=5 // pred_check
        _
      $region46: #{tpu_custom_call.1} parent=5 // pred_check_branch
        %244 = sbr.rel (%p241) target = $region48
      $region47: #{tpu_custom_call.1} parent=5 // pred_region
        %s245 = ssub.s32 %s16, 1
        %p246 = scmp.lt.s32.totalorder %s21, 3
        %s247 = scalar_select %p246, %s21, 3
        %s248 = smul.addr %s247, 2
        %s249 = smul.addr %s248, 8
        %s250 = scalar_lea.vmem %s0, %s249
        %p251 = pneg %p42
        %p252 = pneg %p39
        %p253 = pneg %p63
        %p254 = pneg %p60
        %p255 = pneg %p84
        %p256 = pneg %p81
        %p257 = pneg %p105
        %p258 = pneg %p102
        %p259 = pneg %p126
        %p260 = pneg %p123
        %p261 = pneg %p147
        %p262 = pneg %p144
        %p263 = pneg %p168
        %p264 = pneg %p165
        %p265 = pneg %p194
        %p266 = pneg %p191
        %s267 = sand.u32 %s181, 1
        %s268 = scalar_lea.sflag [#allocation3], %s267
        %s269 = sand.u32 %s181, 1
        %s270 = smul.addr %s269, 8
        %s271 = scalar_lea.vmem [#allocation2], %s270
        %p272 = scmp.lt.s32.totalorder %s21, 3
        %s273 = scalar_select %p272, %s21, 3
        %s274 = smul.addr %s273, 2
        %s275 = smul.addr %s274, 8
        %s276 = scalar_lea.vmem %s0, %s275
        %v277 = vld [vmem:[%s276] sm:$0xff]
        %v278 = vld [vmem:[%s276 + $0x8] sm:$0xff]
        %v279 = vld [vmem:[%s1] sm:$0xff]
        %v280 = vld [vmem:[%s1 + $0x8] sm:$0xff]
        %v281 = vld [vmem:[%s1 + $0x10] sm:$0xff]
        %v282 = vld [vmem:[%s1 + $0x18] sm:$0xff]
        %v283 = vld [vmem:[%s1 + $0x20] sm:$0xff]
        %v284 = vld [vmem:[%s1 + $0x28] sm:$0xff]
        %v285 = vld [vmem:[%s1 + $0x30] sm:$0xff]
        %v286 = vld [vmem:[%s1 + $0x38] sm:$0xff]
        %v287 = vld [vmem:[%s1 + $0x40] sm:$0xff]
        %v288 = vld [vmem:[%s1 + $0x48] sm:$0xff]
        %v289 = vld [vmem:[%s1 + $0x50] sm:$0xff]
        %v290 = vld [vmem:[%s1 + $0x58] sm:$0xff]
        %v291 = vld [vmem:[%s1 + $0x60] sm:$0xff]
        %v292 = vld [vmem:[%s1 + $0x68] sm:$0xff]
        %v293 = vld [vmem:[%s1 + $0x70] sm:$0xff]
        %v294 = vld [vmem:[%s1 + $0x78] sm:$0xff]
        %v295 = vld [vmem:[%s1 + $0x80] sm:$0xf]
        %vm296 = vcmask 31744
        %v298 = vsel %vm296, %v278, 0
        %vm300 = vcmask 1043456
        %v302 = vsel %vm300, %v295, 0
        %304 = vmatpush.msra.mxu0 %v294
        %305 = vmatpush.msra.mxu0 %v293
        %306 = vmatpush.msra.mxu0 %v292
        %307 = vmatpush.msra.mxu0 %v291
        %308 = vmatpush.msra.mxu0 %v290
        %309 = vmatpush.msra.mxu0 %v289
        %310 = vmatpush.msra.mxu0 %v288
        %311 = vmatpush.msra.mxu0 %v287
        %312 = vmatpush.msra.mxu0 %v286
        %313 = vmatpush.msra.mxu0 %v285
        %314 = vmatpush.msra.mxu0 %v284
        %315 = vmatpush.msra.mxu0 %v283
        %316 = vmatpush.msra.mxu0 %v282
        %317 = vmatpush.msra.mxu0 %v281
        %318 = vmatpush.msra.mxu0 %v280
        %319 = vmatpush.msra.mxu0 %v279
        %320 = vmatmul.f32.gmra.mxu0 %v277
        %v321 = vpop.f32.mrf.mxu0
        %v322 = vadd.f32 0.0, %v321
        %323 = vdwg.mxu0
        %324 = vmatpush.msra.mxu0 0.0
        %325 = vmatpush.msra.mxu0 0.0
        %326 = vmatpush.msra.mxu0 0.0
        %327 = vmatpush.msra.mxu0 0.0
        %328 = vmatpush.msra.mxu0 0.0
        %329 = vmatpush.msra.mxu0 0.0
        %330 = vmatpush.msra.mxu0 0.0
        %331 = vmatpush.msra.mxu0 0.0
        %332 = vmatpush.msra.mxu0 0.0
        %333 = vmatpush.msra.mxu0 0.0
        %334 = vmatpush.msra.mxu0 0.0
        %335 = vmatpush.msra.mxu0 0.0
        %336 = vmatpush.msra.mxu0 0.0
        %337 = vmatpush.msra.mxu0 0.0
        %338 = vmatpush.msra.mxu0 0.0
        %339 = vmatpush.msra.mxu0 %v302
        %340 = vmatmul.f32.gmra.mxu0 %v298
        %v341 = vpop.f32.mrf.mxu0
        %v342 = vadd.f32 %v322, %v341
        %343 = vdwg.mxu0
        %s344 = scalar_lea.vmem %s1, 136
        %v345 = vld [vmem:[%s344] sm:$0xff]
        %v346 = vld [vmem:[%s344 + $0x8] sm:$0xff]
        %v347 = vld [vmem:[%s344 + $0x10] sm:$0xff]
        %v348 = vld [vmem:[%s344 + $0x18] sm:$0xff]
        %v349 = vld [vmem:[%s344 + $0x20] sm:$0xff]
        %v350 = vld [vmem:[%s344 + $0x28] sm:$0xff]
        %v351 = vld [vmem:[%s344 + $0x30] sm:$0xff]
        %v352 = vld [vmem:[%s344 + $0x38] sm:$0xff]
        %v353 = vld [vmem:[%s344 + $0x40] sm:$0xff]
        %v354 = vld [vmem:[%s344 + $0x48] sm:$0xff]
        %v355 = vld [vmem:[%s344 + $0x50] sm:$0xff]
        %v356 = vld [vmem:[%s344 + $0x58] sm:$0xff]
        %v357 = vld [vmem:[%s344 + $0x60] sm:$0xff]
        %v358 = vld [vmem:[%s344 + $0x68] sm:$0xff]
        %v359 = vld [vmem:[%s344 + $0x70] sm:$0xff]
        %v360 = vld [vmem:[%s344 + $0x78] sm:$0xff]
        %v361 = vld [vmem:[%s344 + $0x80] sm:$0xf]
        %v363 = vsel %vm300, %v361, 0
        %365 = vmatpush.msra.mxu0 %v360
        %366 = vmatpush.msra.mxu0 %v359
        %367 = vmatpush.msra.mxu0 %v358
        %368 = vmatpush.msra.mxu0 %v357
        %369 = vmatpush.msra.mxu0 %v356
        %370 = vmatpush.msra.mxu0 %v355
        %371 = vmatpush.msra.mxu0 %v354
        %372 = vmatpush.msra.mxu0 %v353
        %373 = vmatpush.msra.mxu0 %v352
        %374 = vmatpush.msra.mxu0 %v351
        %375 = vmatpush.msra.mxu0 %v350
        %376 = vmatpush.msra.mxu0 %v349
        %377 = vmatpush.msra.mxu0 %v348
        %378 = vmatpush.msra.mxu0 %v347
        %379 = vmatpush.msra.mxu0 %v346
        %380 = vmatpush.msra.mxu0 %v345
        %381 = vmatmul.f32.gmra.mxu0 %v277
        %v382 = vpop.f32.mrf.mxu0
        %v383 = vadd.f32 0.0, %v382
        %384 = vdwg.mxu0
        %385 = vmatpush.msra.mxu0 0.0
        %386 = vmatpush.msra.mxu0 0.0
        %387 = vmatpush.msra.mxu0 0.0
        %388 = vmatpush.msra.mxu0 0.0
        %389 = vmatpush.msra.mxu0 0.0
        %390 = vmatpush.msra.mxu0 0.0
        %391 = vmatpush.msra.mxu0 0.0
        %392 = vmatpush.msra.mxu0 0.0
        %393 = vmatpush.msra.mxu0 0.0
        %394 = vmatpush.msra.mxu0 0.0
        %395 = vmatpush.msra.mxu0 0.0
        %396 = vmatpush.msra.mxu0 0.0
        %397 = vmatpush.msra.mxu0 0.0
        %398 = vmatpush.msra.mxu0 0.0
        %399 = vmatpush.msra.mxu0 0.0
        %400 = vmatpush.msra.mxu0 %v363
        %401 = vmatmul.f32.gmra.mxu0 %v298
        %v402 = vpop.f32.mrf.mxu0
        %v403 = vadd.f32 %v383, %v402
        %404 = vdwg.mxu0
        %v405 = vmax.f32 %v342, %v403
        %s406 = scalar_lea.vmem %s1, 272
        %v407 = vld [vmem:[%s406] sm:$0xff]
        %v408 = vld [vmem:[%s406 + $0x8] sm:$0xff]
        %v409 = vld [vmem:[%s406 + $0x10] sm:$0xff]
        %v410 = vld [vmem:[%s406 + $0x18] sm:$0xff]
        %v411 = vld [vmem:[%s406 + $0x20] sm:$0xff]
        %v412 = vld [vmem:[%s406 + $0x28] sm:$0xff]
        %v413 = vld [vmem:[%s406 + $0x30] sm:$0xff]
        %v414 = vld [vmem:[%s406 + $0x38] sm:$0xff]
        %v415 = vld [vmem:[%s406 + $0x40] sm:$0xff]
        %v416 = vld [vmem:[%s406 + $0x48] sm:$0xff]
        %v417 = vld [vmem:[%s406 + $0x50] sm:$0xff]
        %v418 = vld [vmem:[%s406 + $0x58] sm:$0xff]
        %v419 = vld [vmem:[%s406 + $0x60] sm:$0xff]
        %v420 = vld [vmem:[%s406 + $0x68] sm:$0xff]
        %v421 = vld [vmem:[%s406 + $0x70] sm:$0xff]
        %v422 = vld [vmem:[%s406 + $0x78] sm:$0xff]
        %v423 = vld [vmem:[%s406 + $0x80] sm:$0xf]
        %v425 = vsel %vm300, %v423, 0
        %427 = vmatpush.msra.mxu0 %v422
        %428 = vmatpush.msra.mxu0 %v421
        %429 = vmatpush.msra.mxu0 %v420
        %430 = vmatpush.msra.mxu0 %v419
        %431 = vmatpush.msra.mxu0 %v418
        %432 = vmatpush.msra.mxu0 %v417
        %433 = vmatpush.msra.mxu0 %v416
        %434 = vmatpush.msra.mxu0 %v415
        %435 = vmatpush.msra.mxu0 %v414
        %436 = vmatpush.msra.mxu0 %v413
        %437 = vmatpush.msra.mxu0 %v412
        %438 = vmatpush.msra.mxu0 %v411
        %439 = vmatpush.msra.mxu0 %v410
        %440 = vmatpush.msra.mxu0 %v409
        %441 = vmatpush.msra.mxu0 %v408
        %442 = vmatpush.msra.mxu0 %v407
        %443 = vmatmul.f32.gmra.mxu0 %v277
        %v444 = vpop.f32.mrf.mxu0
        %v445 = vadd.f32 0.0, %v444
        %446 = vdwg.mxu0
        %447 = vmatpush.msra.mxu0 0.0
        %448 = vmatpush.msra.mxu0 0.0
        %449 = vmatpush.msra.mxu0 0.0
        %450 = vmatpush.msra.mxu0 0.0
        %451 = vmatpush.msra.mxu0 0.0
        %452 = vmatpush.msra.mxu0 0.0
        %453 = vmatpush.msra.mxu0 0.0
        %454 = vmatpush.msra.mxu0 0.0
        %455 = vmatpush.msra.mxu0 0.0
        %456 = vmatpush.msra.mxu0 0.0
        %457 = vmatpush.msra.mxu0 0.0
        %458 = vmatpush.msra.mxu0 0.0
        %459 = vmatpush.msra.mxu0 0.0
        %460 = vmatpush.msra.mxu0 0.0
        %461 = vmatpush.msra.mxu0 0.0
        %462 = vmatpush.msra.mxu0 %v425
        %463 = vmatmul.f32.gmra.mxu0 %v298
        %v464 = vpop.f32.mrf.mxu0
        %v465 = vadd.f32 %v445, %v464
        %466 = vdwg.mxu0
        %v467 = vmax.f32 %v405, %v465
        %s468 = scalar_lea.vmem %s1, 408
        %v469 = vld [vmem:[%s468] sm:$0xff]
        %v470 = vld [vmem:[%s468 + $0x8] sm:$0xff]
        %v471 = vld [vmem:[%s468 + $0x10] sm:$0xff]
        %v472 = vld [vmem:[%s468 + $0x18] sm:$0xff]
        %v473 = vld [vmem:[%s468 + $0x20] sm:$0xff]
        %v474 = vld [vmem:[%s468 + $0x28] sm:$0xff]
        %v475 = vld [vmem:[%s468 + $0x30] sm:$0xff]
        %v476 = vld [vmem:[%s468 + $0x38] sm:$0xff]
        %v477 = vld [vmem:[%s468 + $0x40] sm:$0xff]
        %v478 = vld [vmem:[%s468 + $0x48] sm:$0xff]
        %v479 = vld [vmem:[%s468 + $0x50] sm:$0xff]
        %v480 = vld [vmem:[%s468 + $0x58] sm:$0xff]
        %v481 = vld [vmem:[%s468 + $0x60] sm:$0xff]
        %v482 = vld [vmem:[%s468 + $0x68] sm:$0xff]
        %v483 = vld [vmem:[%s468 + $0x70] sm:$0xff]
        %v484 = vld [vmem:[%s468 + $0x78] sm:$0xff]
        %v485 = vld [vmem:[%s468 + $0x80] sm:$0xf]
        %v487 = vsel %vm300, %v485, 0
        %489 = vmatpush.msra.mxu0 %v484
        %490 = vmatpush.msra.mxu0 %v483
        %491 = vmatpush.msra.mxu0 %v482
        %492 = vmatpush.msra.mxu0 %v481
        %493 = vmatpush.msra.mxu0 %v480
        %494 = vmatpush.msra.mxu0 %v479
        %495 = vmatpush.msra.mxu0 %v478
        %496 = vmatpush.msra.mxu0 %v477
        %497 = vmatpush.msra.mxu0 %v476
        %498 = vmatpush.msra.mxu0 %v475
        %499 = vmatpush.msra.mxu0 %v474
        %500 = vmatpush.msra.mxu0 %v473
        %501 = vmatpush.msra.mxu0 %v472
        %502 = vmatpush.msra.mxu0 %v471
        %503 = vmatpush.msra.mxu0 %v470
        %504 = vmatpush.msra.mxu0 %v469
        %505 = vmatmul.f32.gmra.mxu0 %v277
        %v506 = vpop.f32.mrf.mxu0
        %v507 = vadd.f32 0.0, %v506
        %508 = vdwg.mxu0
        %509 = vmatpush.msra.mxu0 0.0
        %510 = vmatpush.msra.mxu0 0.0
        %511 = vmatpush.msra.mxu0 0.0
        %512 = vmatpush.msra.mxu0 0.0
        %513 = vmatpush.msra.mxu0 0.0
        %514 = vmatpush.msra.mxu0 0.0
        %515 = vmatpush.msra.mxu0 0.0
        %516 = vmatpush.msra.mxu0 0.0
        %517 = vmatpush.msra.mxu0 0.0
        %518 = vmatpush.msra.mxu0 0.0
        %519 = vmatpush.msra.mxu0 0.0
        %520 = vmatpush.msra.mxu0 0.0
        %521 = vmatpush.msra.mxu0 0.0
        %522 = vmatpush.msra.mxu0 0.0
        %523 = vmatpush.msra.mxu0 0.0
        %524 = vmatpush.msra.mxu0 %v487
        %525 = vmatmul.f32.gmra.mxu0 %v298
        %v526 = vpop.f32.mrf.mxu0
        %v527 = vadd.f32 %v507, %v526
        %528 = vdwg.mxu0
        %v529 = vmax.f32 %v467, %v527
        %s530 = scalar_lea.vmem %s1, 544
        %v531 = vld [vmem:[%s530] sm:$0xff]
        %v532 = vld [vmem:[%s530 + $0x8] sm:$0xff]
        %v533 = vld [vmem:[%s530 + $0x10] sm:$0xff]
        %v534 = vld [vmem:[%s530 + $0x18] sm:$0xff]
        %v535 = vld [vmem:[%s530 + $0x20] sm:$0xff]
        %v536 = vld [vmem:[%s530 + $0x28] sm:$0xff]
        %v537 = vld [vmem:[%s530 + $0x30] sm:$0xff]
        %v538 = vld [vmem:[%s530 + $0x38] sm:$0xff]
        %v539 = vld [vmem:[%s530 + $0x40] sm:$0xff]
        %v540 = vld [vmem:[%s530 + $0x48] sm:$0xff]
        %v541 = vld [vmem:[%s530 + $0x50] sm:$0xff]
        %v542 = vld [vmem:[%s530 + $0x58] sm:$0xff]
        %v543 = vld [vmem:[%s530 + $0x60] sm:$0xff]
        %v544 = vld [vmem:[%s530 + $0x68] sm:$0xff]
        %v545 = vld [vmem:[%s530 + $0x70] sm:$0xff]
        %v546 = vld [vmem:[%s530 + $0x78] sm:$0xff]
        %v547 = vld [vmem:[%s530 + $0x80] sm:$0xf]
        %v549 = vsel %vm300, %v547, 0
        %551 = vmatpush.msra.mxu0 %v546
        %552 = vmatpush.msra.mxu0 %v545
        %553 = vmatpush.msra.mxu0 %v544
        %554 = vmatpush.msra.mxu0 %v543
        %555 = vmatpush.msra.mxu0 %v542
        %556 = vmatpush.msra.mxu0 %v541
        %557 = vmatpush.msra.mxu0 %v540
        %558 = vmatpush.msra.mxu0 %v539
        %559 = vmatpush.msra.mxu0 %v538
        %560 = vmatpush.msra.mxu0 %v537
        %561 = vmatpush.msra.mxu0 %v536
        %562 = vmatpush.msra.mxu0 %v535
        %563 = vmatpush.msra.mxu0 %v534
        %564 = vmatpush.msra.mxu0 %v533
        %565 = vmatpush.msra.mxu0 %v532
        %566 = vmatpush.msra.mxu0 %v531
        %567 = vmatmul.f32.gmra.mxu0 %v277
        %v568 = vpop.f32.mrf.mxu0
        %v569 = vadd.f32 0.0, %v568
        %570 = vdwg.mxu0
        %571 = vmatpush.msra.mxu0 0.0
        %572 = vmatpush.msra.mxu0 0.0
        %573 = vmatpush.msra.mxu0 0.0
        %574 = vmatpush.msra.mxu0 0.0
        %575 = vmatpush.msra.mxu0 0.0
        %576 = vmatpush.msra.mxu0 0.0
        %577 = vmatpush.msra.mxu0 0.0
        %578 = vmatpush.msra.mxu0 0.0
        %579 = vmatpush.msra.mxu0 0.0
        %580 = vmatpush.msra.mxu0 0.0
        %581 = vmatpush.msra.mxu0 0.0
        %582 = vmatpush.msra.mxu0 0.0
        %583 = vmatpush.msra.mxu0 0.0
        %584 = vmatpush.msra.mxu0 0.0
        %585 = vmatpush.msra.mxu0 0.0
        %586 = vmatpush.msra.mxu0 %v549
        %587 = vmatmul.f32.gmra.mxu0 %v298
        %v588 = vpop.f32.mrf.mxu0
        %v589 = vadd.f32 %v569, %v588
        %590 = vdwg.mxu0
        %v591 = vmax.f32 %v529, %v589
        %s592 = scalar_lea.vmem %s1, 680
        %v593 = vld [vmem:[%s592] sm:$0xff]
        %v594 = vld [vmem:[%s592 + $0x8] sm:$0xff]
        %v595 = vld [vmem:[%s592 + $0x10] sm:$0xff]
        %v596 = vld [vmem:[%s592 + $0x18] sm:$0xff]
        %v597 = vld [vmem:[%s592 + $0x20] sm:$0xff]
        %v598 = vld [vmem:[%s592 + $0x28] sm:$0xff]
        %v599 = vld [vmem:[%s592 + $0x30] sm:$0xff]
        %v600 = vld [vmem:[%s592 + $0x38] sm:$0xff]
        %v601 = vld [vmem:[%s592 + $0x40] sm:$0xff]
        %v602 = vld [vmem:[%s592 + $0x48] sm:$0xff]
        %v603 = vld [vmem:[%s592 + $0x50] sm:$0xff]
        %v604 = vld [vmem:[%s592 + $0x58] sm:$0xff]
        %v605 = vld [vmem:[%s592 + $0x60] sm:$0xff]
        %v606 = vld [vmem:[%s592 + $0x68] sm:$0xff]
        %v607 = vld [vmem:[%s592 + $0x70] sm:$0xff]
        %v608 = vld [vmem:[%s592 + $0x78] sm:$0xff]
        %v609 = vld [vmem:[%s592 + $0x80] sm:$0xf]
        %v611 = vsel %vm300, %v609, 0
        %613 = vmatpush.msra.mxu0 %v608
        %614 = vmatpush.msra.mxu0 %v607
        %615 = vmatpush.msra.mxu0 %v606
        %616 = vmatpush.msra.mxu0 %v605
        %617 = vmatpush.msra.mxu0 %v604
        %618 = vmatpush.msra.mxu0 %v603
        %619 = vmatpush.msra.mxu0 %v602
        %620 = vmatpush.msra.mxu0 %v601
        %621 = vmatpush.msra.mxu0 %v600
        %622 = vmatpush.msra.mxu0 %v599
        %623 = vmatpush.msra.mxu0 %v598
        %624 = vmatpush.msra.mxu0 %v597
        %625 = vmatpush.msra.mxu0 %v596
        %626 = vmatpush.msra.mxu0 %v595
        %627 = vmatpush.msra.mxu0 %v594
        %628 = vmatpush.msra.mxu0 %v593
        %629 = vmatmul.f32.gmra.mxu0 %v277
        %v630 = vpop.f32.mrf.mxu0
        %v631 = vadd.f32 0.0, %v630
        %632 = vdwg.mxu0
        %633 = vmatpush.msra.mxu0 0.0
        %634 = vmatpush.msra.mxu0 0.0
        %635 = vmatpush.msra.mxu0 0.0
        %636 = vmatpush.msra.mxu0 0.0
        %637 = vmatpush.msra.mxu0 0.0
        %638 = vmatpush.msra.mxu0 0.0
        %639 = vmatpush.msra.mxu0 0.0
        %640 = vmatpush.msra.mxu0 0.0
        %641 = vmatpush.msra.mxu0 0.0
        %642 = vmatpush.msra.mxu0 0.0
        %643 = vmatpush.msra.mxu0 0.0
        %644 = vmatpush.msra.mxu0 0.0
        %645 = vmatpush.msra.mxu0 0.0
        %646 = vmatpush.msra.mxu0 0.0
        %647 = vmatpush.msra.mxu0 0.0
        %648 = vmatpush.msra.mxu0 %v611
        %649 = vmatmul.f32.gmra.mxu0 %v298
        %v650 = vpop.f32.mrf.mxu0
        %v651 = vadd.f32 %v631, %v650
        %652 = vdwg.mxu0
        %v653 = vmax.f32 %v591, %v651
        %s654 = scalar_lea.vmem %s1, 816
        %v655 = vld [vmem:[%s654] sm:$0xff]
        %v656 = vld [vmem:[%s654 + $0x8] sm:$0xff]
        %v657 = vld [vmem:[%s654 + $0x10] sm:$0xff]
        %v658 = vld [vmem:[%s654 + $0x18] sm:$0xff]
        %v659 = vld [vmem:[%s654 + $0x20] sm:$0xff]
        %v660 = vld [vmem:[%s654 + $0x28] sm:$0xff]
        %v661 = vld [vmem:[%s654 + $0x30] sm:$0xff]
        %v662 = vld [vmem:[%s654 + $0x38] sm:$0xff]
        %v663 = vld [vmem:[%s654 + $0x40] sm:$0xff]
        %v664 = vld [vmem:[%s654 + $0x48] sm:$0xff]
        %v665 = vld [vmem:[%s654 + $0x50] sm:$0xff]
        %v666 = vld [vmem:[%s654 + $0x58] sm:$0xff]
        %v667 = vld [vmem:[%s654 + $0x60] sm:$0xff]
        %v668 = vld [vmem:[%s654 + $0x68] sm:$0xff]
        %v669 = vld [vmem:[%s654 + $0x70] sm:$0xff]
        %v670 = vld [vmem:[%s654 + $0x78] sm:$0xff]
        %v671 = vld [vmem:[%s654 + $0x80] sm:$0xf]
        %v673 = vsel %vm300, %v671, 0
        %675 = vmatpush.msra.mxu0 %v670
        %676 = vmatpush.msra.mxu0 %v669
        %677 = vmatpush.msra.mxu0 %v668
        %678 = vmatpush.msra.mxu0 %v667
        %679 = vmatpush.msra.mxu0 %v666
        %680 = vmatpush.msra.mxu0 %v665
        %681 = vmatpush.msra.mxu0 %v664
        %682 = vmatpush.msra.mxu0 %v663
        %683 = vmatpush.msra.mxu0 %v662
        %684 = vmatpush.msra.mxu0 %v661
        %685 = vmatpush.msra.mxu0 %v660
        %686 = vmatpush.msra.mxu0 %v659
        %687 = vmatpush.msra.mxu0 %v658
        %688 = vmatpush.msra.mxu0 %v657
        %689 = vmatpush.msra.mxu0 %v656
        %690 = vmatpush.msra.mxu0 %v655
        %691 = vmatmul.f32.gmra.mxu0 %v277
        %v692 = vpop.f32.mrf.mxu0
        %v693 = vadd.f32 0.0, %v692
        %694 = vdwg.mxu0
        %695 = vmatpush.msra.mxu0 0.0
        %696 = vmatpush.msra.mxu0 0.0
        %697 = vmatpush.msra.mxu0 0.0
        %698 = vmatpush.msra.mxu0 0.0
        %699 = vmatpush.msra.mxu0 0.0
        %700 = vmatpush.msra.mxu0 0.0
        %701 = vmatpush.msra.mxu0 0.0
        %702 = vmatpush.msra.mxu0 0.0
        %703 = vmatpush.msra.mxu0 0.0
        %704 = vmatpush.msra.mxu0 0.0
        %705 = vmatpush.msra.mxu0 0.0
        %706 = vmatpush.msra.mxu0 0.0
        %707 = vmatpush.msra.mxu0 0.0
        %708 = vmatpush.msra.mxu0 0.0
        %709 = vmatpush.msra.mxu0 0.0
        %710 = vmatpush.msra.mxu0 %v673
        %711 = vmatmul.f32.gmra.mxu0 %v298
        %v712 = vpop.f32.mrf.mxu0
        %v713 = vadd.f32 %v693, %v712
        %714 = vdwg.mxu0
        %v715 = vmax.f32 %v653, %v713
        %s716 = scalar_lea.vmem %s1, 952
        %v717 = vld [vmem:[%s716] sm:$0xff]
        %v718 = vld [vmem:[%s716 + $0x8] sm:$0xff]
        %v719 = vld [vmem:[%s716 + $0x10] sm:$0xff]
        %v720 = vld [vmem:[%s716 + $0x18] sm:$0xff]
        %v721 = vld [vmem:[%s716 + $0x20] sm:$0xff]
        %v722 = vld [vmem:[%s716 + $0x28] sm:$0xff]
        %v723 = vld [vmem:[%s716 + $0x30] sm:$0xff]
        %v724 = vld [vmem:[%s716 + $0x38] sm:$0xff]
        %v725 = vld [vmem:[%s716 + $0x40] sm:$0xff]
        %v726 = vld [vmem:[%s716 + $0x48] sm:$0xff]
        %v727 = vld [vmem:[%s716 + $0x50] sm:$0xff]
        %v728 = vld [vmem:[%s716 + $0x58] sm:$0xff]
        %v729 = vld [vmem:[%s716 + $0x60] sm:$0xff]
        %v730 = vld [vmem:[%s716 + $0x68] sm:$0xff]
        %v731 = vld [vmem:[%s716 + $0x70] sm:$0xff]
        %v732 = vld [vmem:[%s716 + $0x78] sm:$0xff]
        %v733 = vld [vmem:[%s716 + $0x80] sm:$0xf]
        %v735 = vsel %vm300, %v733, 0
        %737 = vmatpush.msra.mxu0 %v732
        %738 = vmatpush.msra.mxu0 %v731
        %739 = vmatpush.msra.mxu0 %v730
        %740 = vmatpush.msra.mxu0 %v729
        %741 = vmatpush.msra.mxu0 %v728
        %742 = vmatpush.msra.mxu0 %v727
        %743 = vmatpush.msra.mxu0 %v726
        %744 = vmatpush.msra.mxu0 %v725
        %745 = vmatpush.msra.mxu0 %v724
        %746 = vmatpush.msra.mxu0 %v723
        %747 = vmatpush.msra.mxu0 %v722
        %748 = vmatpush.msra.mxu0 %v721
        %749 = vmatpush.msra.mxu0 %v720
        %750 = vmatpush.msra.mxu0 %v719
        %751 = vmatpush.msra.mxu0 %v718
        %752 = vmatpush.msra.mxu0 %v717
        %753 = vmatmul.f32.gmra.mxu0 %v277
        %v754 = vpop.f32.mrf.mxu0
        %v755 = vadd.f32 0.0, %v754
        %756 = vdwg.mxu0
        %757 = vmatpush.msra.mxu0 0.0
        %758 = vmatpush.msra.mxu0 0.0
        %759 = vmatpush.msra.mxu0 0.0
        %760 = vmatpush.msra.mxu0 0.0
        %761 = vmatpush.msra.mxu0 0.0
        %762 = vmatpush.msra.mxu0 0.0
        %763 = vmatpush.msra.mxu0 0.0
        %764 = vmatpush.msra.mxu0 0.0
        %765 = vmatpush.msra.mxu0 0.0
        %766 = vmatpush.msra.mxu0 0.0
        %767 = vmatpush.msra.mxu0 0.0
        %768 = vmatpush.msra.mxu0 0.0
        %769 = vmatpush.msra.mxu0 0.0
        %770 = vmatpush.msra.mxu0 0.0
        %771 = vmatpush.msra.mxu0 0.0
        %772 = vmatpush.msra.mxu0 %v735
        %773 = vmatmul.f32.gmra.mxu0 %v298
        %v774 = vpop.f32.mrf.mxu0
        %v775 = vadd.f32 %v755, %v774
        %776 = vdwg.mxu0
        %v777 = vmax.f32 %v715, %v775
        %s778 = scalar_lea.vmem %s1, 1088
        %v779 = vld [vmem:[%s778] sm:$0xff]
        %v780 = vld [vmem:[%s778 + $0x8] sm:$0xff]
        %v781 = vld [vmem:[%s778 + $0x10] sm:$0xff]
        %v782 = vld [vmem:[%s778 + $0x18] sm:$0xff]
        %v783 = vld [vmem:[%s778 + $0x20] sm:$0xff]
        %v784 = vld [vmem:[%s778 + $0x28] sm:$0xff]
        %v785 = vld [vmem:[%s778 + $0x30] sm:$0xff]
        %v786 = vld [vmem:[%s778 + $0x38] sm:$0xff]
        %v787 = vld [vmem:[%s778 + $0x40] sm:$0xff]
        %v788 = vld [vmem:[%s778 + $0x48] sm:$0xff]
        %v789 = vld [vmem:[%s778 + $0x50] sm:$0xff]
        %v790 = vld [vmem:[%s778 + $0x58] sm:$0xff]
        %v791 = vld [vmem:[%s778 + $0x60] sm:$0xff]
        %v792 = vld [vmem:[%s778 + $0x68] sm:$0xff]
        %v793 = vld [vmem:[%s778 + $0x70] sm:$0xff]
        %v794 = vld [vmem:[%s778 + $0x78] sm:$0xff]
        %v795 = vld [vmem:[%s778 + $0x80] sm:$0xf]
        %v797 = vsel %vm300, %v795, 0
        %799 = vmatpush.msra.mxu0 %v794
        %800 = vmatpush.msra.mxu0 %v793
        %801 = vmatpush.msra.mxu0 %v792
        %802 = vmatpush.msra.mxu0 %v791
        %803 = vmatpush.msra.mxu0 %v790
        %804 = vmatpush.msra.mxu0 %v789
        %805 = vmatpush.msra.mxu0 %v788
        %806 = vmatpush.msra.mxu0 %v787
        %807 = vmatpush.msra.mxu0 %v786
        %808 = vmatpush.msra.mxu0 %v785
        %809 = vmatpush.msra.mxu0 %v784
        %810 = vmatpush.msra.mxu0 %v783
        %811 = vmatpush.msra.mxu0 %v782
        %812 = vmatpush.msra.mxu0 %v781
        %813 = vmatpush.msra.mxu0 %v780
        %814 = vmatpush.msra.mxu0 %v779
        %815 = vmatmul.f32.gmra.mxu0 %v277
        %v816 = vpop.f32.mrf.mxu0
        %v817 = vadd.f32 0.0, %v816
        %818 = vdwg.mxu0
        %819 = vmatpush.msra.mxu0 0.0
        %820 = vmatpush.msra.mxu0 0.0
        %821 = vmatpush.msra.mxu0 0.0
        %822 = vmatpush.msra.mxu0 0.0
        %823 = vmatpush.msra.mxu0 0.0
        %824 = vmatpush.msra.mxu0 0.0
        %825 = vmatpush.msra.mxu0 0.0
        %826 = vmatpush.msra.mxu0 0.0
        %827 = vmatpush.msra.mxu0 0.0
        %828 = vmatpush.msra.mxu0 0.0
        %829 = vmatpush.msra.mxu0 0.0
        %830 = vmatpush.msra.mxu0 0.0
        %831 = vmatpush.msra.mxu0 0.0
        %832 = vmatpush.msra.mxu0 0.0
        %833 = vmatpush.msra.mxu0 0.0
        %834 = vmatpush.msra.mxu0 %v797
        %835 = vmatmul.f32.gmra.mxu0 %v298
        %v836 = vpop.f32.mrf.mxu0
        %v837 = vadd.f32 %v817, %v836
        %838 = vdwg.mxu0
        %v839 = vmax.f32 %v777, %v837
        %s840 = scalar_lea.vmem %s1, 1224
        %v841 = vld [vmem:[%s840] sm:$0xff]
        %v842 = vld [vmem:[%s840 + $0x8] sm:$0xff]
        %v843 = vld [vmem:[%s840 + $0x10] sm:$0xff]
        %v844 = vld [vmem:[%s840 + $0x18] sm:$0xff]
        %v845 = vld [vmem:[%s840 + $0x20] sm:$0xff]
        %v846 = vld [vmem:[%s840 + $0x28] sm:$0xff]
        %v847 = vld [vmem:[%s840 + $0x30] sm:$0xff]
        %v848 = vld [vmem:[%s840 + $0x38] sm:$0xff]
        %v849 = vld [vmem:[%s840 + $0x40] sm:$0xff]
        %v850 = vld [vmem:[%s840 + $0x48] sm:$0xff]
        %v851 = vld [vmem:[%s840 + $0x50] sm:$0xff]
        %v852 = vld [vmem:[%s840 + $0x58] sm:$0xff]
        %v853 = vld [vmem:[%s840 + $0x60] sm:$0xff]
        %v854 = vld [vmem:[%s840 + $0x68] sm:$0xff]
        %v855 = vld [vmem:[%s840 + $0x70] sm:$0xff]
        %v856 = vld [vmem:[%s840 + $0x78] sm:$0xff]
        %v857 = vld [vmem:[%s840 + $0x80] sm:$0xf]
        %v859 = vsel %vm300, %v857, 0
        %861 = vmatpush.msra.mxu0 %v856
        %862 = vmatpush.msra.mxu0 %v855
        %863 = vmatpush.msra.mxu0 %v854
        %864 = vmatpush.msra.mxu0 %v853
        %865 = vmatpush.msra.mxu0 %v852
        %866 = vmatpush.msra.mxu0 %v851
        %867 = vmatpush.msra.mxu0 %v850
        %868 = vmatpush.msra.mxu0 %v849
        %869 = vmatpush.msra.mxu0 %v848
        %870 = vmatpush.msra.mxu0 %v847
        %871 = vmatpush.msra.mxu0 %v846
        %872 = vmatpush.msra.mxu0 %v845
        %873 = vmatpush.msra.mxu0 %v844
        %874 = vmatpush.msra.mxu0 %v843
        %875 = vmatpush.msra.mxu0 %v842
        %876 = vmatpush.msra.mxu0 %v841
        %877 = vmatmul.f32.gmra.mxu0 %v277
        %v878 = vpop.f32.mrf.mxu0
        %v879 = vadd.f32 0.0, %v878
        %880 = vdwg.mxu0
        %881 = vmatpush.msra.mxu0 0.0
        %882 = vmatpush.msra.mxu0 0.0
        %883 = vmatpush.msra.mxu0 0.0
        %884 = vmatpush.msra.mxu0 0.0
        %885 = vmatpush.msra.mxu0 0.0
        %886 = vmatpush.msra.mxu0 0.0
        %887 = vmatpush.msra.mxu0 0.0
        %888 = vmatpush.msra.mxu0 0.0
        %889 = vmatpush.msra.mxu0 0.0
        %890 = vmatpush.msra.mxu0 0.0
        %891 = vmatpush.msra.mxu0 0.0
        %892 = vmatpush.msra.mxu0 0.0
        %893 = vmatpush.msra.mxu0 0.0
        %894 = vmatpush.msra.mxu0 0.0
        %895 = vmatpush.msra.mxu0 0.0
        %896 = vmatpush.msra.mxu0 %v859
        %897 = vmatmul.f32.gmra.mxu0 %v298
        %v898 = vpop.f32.mrf.mxu0
        %v899 = vadd.f32 %v879, %v898
        %900 = vdwg.mxu0
        %v901 = vmax.f32 %v839, %v899
        %s902 = scalar_lea.vmem %s1, 1360
        %v903 = vld [vmem:[%s902] sm:$0xff]
        %v904 = vld [vmem:[%s902 + $0x8] sm:$0xff]
        %v905 = vld [vmem:[%s902 + $0x10] sm:$0xff]
        %v906 = vld [vmem:[%s902 + $0x18] sm:$0xff]
        %v907 = vld [vmem:[%s902 + $0x20] sm:$0xff]
        %v908 = vld [vmem:[%s902 + $0x28] sm:$0xff]
        %v909 = vld [vmem:[%s902 + $0x30] sm:$0xff]
        %v910 = vld [vmem:[%s902 + $0x38] sm:$0xff]
        %v911 = vld [vmem:[%s902 + $0x40] sm:$0xff]
        %v912 = vld [vmem:[%s902 + $0x48] sm:$0xff]
        %v913 = vld [vmem:[%s902 + $0x50] sm:$0xff]
        %v914 = vld [vmem:[%s902 + $0x58] sm:$0xff]
        %v915 = vld [vmem:[%s902 + $0x60] sm:$0xff]
        %v916 = vld [vmem:[%s902 + $0x68] sm:$0xff]
        %v917 = vld [vmem:[%s902 + $0x70] sm:$0xff]
        %v918 = vld [vmem:[%s902 + $0x78] sm:$0xff]
        %v919 = vld [vmem:[%s902 + $0x80] sm:$0xf]
        %v921 = vsel %vm300, %v919, 0
        %923 = vmatpush.msra.mxu0 %v918
        %924 = vmatpush.msra.mxu0 %v917
        %925 = vmatpush.msra.mxu0 %v916
        %926 = vmatpush.msra.mxu0 %v915
        %927 = vmatpush.msra.mxu0 %v914
        %928 = vmatpush.msra.mxu0 %v913
        %929 = vmatpush.msra.mxu0 %v912
        %930 = vmatpush.msra.mxu0 %v911
        %931 = vmatpush.msra.mxu0 %v910
        %932 = vmatpush.msra.mxu0 %v909
        %933 = vmatpush.msra.mxu0 %v908
        %934 = vmatpush.msra.mxu0 %v907
        %935 = vmatpush.msra.mxu0 %v906
        %936 = vmatpush.msra.mxu0 %v905
        %937 = vmatpush.msra.mxu0 %v904
        %938 = vmatpush.msra.mxu0 %v903
        %939 = vmatmul.f32.gmra.mxu0 %v277
        %v940 = vpop.f32.mrf.mxu0
        %v941 = vadd.f32 0.0, %v940
        %942 = vdwg.mxu0
        %943 = vmatpush.msra.mxu0 0.0
        %944 = vmatpush.msra.mxu0 0.0
        %945 = vmatpush.msra.mxu0 0.0
        %946 = vmatpush.msra.mxu0 0.0
        %947 = vmatpush.msra.mxu0 0.0
        %948 = vmatpush.msra.mxu0 0.0
        %949 = vmatpush.msra.mxu0 0.0
        %950 = vmatpush.msra.mxu0 0.0
        %951 = vmatpush.msra.mxu0 0.0
        %952 = vmatpush.msra.mxu0 0.0
        %953 = vmatpush.msra.mxu0 0.0
        %954 = vmatpush.msra.mxu0 0.0
        %955 = vmatpush.msra.mxu0 0.0
        %956 = vmatpush.msra.mxu0 0.0
        %957 = vmatpush.msra.mxu0 0.0
        %958 = vmatpush.msra.mxu0 %v921
        %959 = vmatmul.f32.gmra.mxu0 %v298
        %v960 = vpop.f32.mrf.mxu0
        %v961 = vadd.f32 %v941, %v960
        %962 = vdwg.mxu0
        %v963 = vmax.f32 %v901, %v961
        %s964 = scalar_lea.vmem %s1, 1496
        %v965 = vld [vmem:[%s964] sm:$0xff]
        %v966 = vld [vmem:[%s964 + $0x8] sm:$0xff]
        %v967 = vld [vmem:[%s964 + $0x10] sm:$0xff]
        %v968 = vld [vmem:[%s964 + $0x18] sm:$0xff]
        %v969 = vld [vmem:[%s964 + $0x20] sm:$0xff]
        %v970 = vld [vmem:[%s964 + $0x28] sm:$0xff]
        %v971 = vld [vmem:[%s964 + $0x30] sm:$0xff]
        %v972 = vld [vmem:[%s964 + $0x38] sm:$0xff]
        %v973 = vld [vmem:[%s964 + $0x40] sm:$0xff]
        %v974 = vld [vmem:[%s964 + $0x48] sm:$0xff]
        %v975 = vld [vmem:[%s964 + $0x50] sm:$0xff]
        %v976 = vld [vmem:[%s964 + $0x58] sm:$0xff]
        %v977 = vld [vmem:[%s964 + $0x60] sm:$0xff]
        %v978 = vld [vmem:[%s964 + $0x68] sm:$0xff]
        %v979 = vld [vmem:[%s964 + $0x70] sm:$0xff]
        %v980 = vld [vmem:[%s964 + $0x78] sm:$0xff]
        %v981 = vld [vmem:[%s964 + $0x80] sm:$0xf]
        %v983 = vsel %vm300, %v981, 0
        %985 = vmatpush.msra.mxu0 %v980
        %986 = vmatpush.msra.mxu0 %v979
        %987 = vmatpush.msra.mxu0 %v978
        %988 = vmatpush.msra.mxu0 %v977
        %989 = vmatpush.msra.mxu0 %v976
        %990 = vmatpush.msra.mxu0 %v975
        %991 = vmatpush.msra.mxu0 %v974
        %992 = vmatpush.msra.mxu0 %v973
        %993 = vmatpush.msra.mxu0 %v972
        %994 = vmatpush.msra.mxu0 %v971
        %995 = vmatpush.msra.mxu0 %v970
        %996 = vmatpush.msra.mxu0 %v969
        %997 = vmatpush.msra.mxu0 %v968
        %998 = vmatpush.msra.mxu0 %v967
        %999 = vmatpush.msra.mxu0 %v966
        %1000 = vmatpush.msra.mxu0 %v965
        %1001 = vmatmul.f32.gmra.mxu0 %v277
        %v1002 = vpop.f32.mrf.mxu0
        %v1003 = vadd.f32 0.0, %v1002
        %1004 = vdwg.mxu0
        %1005 = vmatpush.msra.mxu0 0.0
        %1006 = vmatpush.msra.mxu0 0.0
        %1007 = vmatpush.msra.mxu0 0.0
        %1008 = vmatpush.msra.mxu0 0.0
        %1009 = vmatpush.msra.mxu0 0.0
        %1010 = vmatpush.msra.mxu0 0.0
        %1011 = vmatpush.msra.mxu0 0.0
        %1012 = vmatpush.msra.mxu0 0.0
        %1013 = vmatpush.msra.mxu0 0.0
        %1014 = vmatpush.msra.mxu0 0.0
        %1015 = vmatpush.msra.mxu0 0.0
        %1016 = vmatpush.msra.mxu0 0.0
        %1017 = vmatpush.msra.mxu0 0.0
        %1018 = vmatpush.msra.mxu0 0.0
        %1019 = vmatpush.msra.mxu0 0.0
        %1020 = vmatpush.msra.mxu0 %v983
        %1021 = vmatmul.f32.gmra.mxu0 %v298
        %v1022 = vpop.f32.mrf.mxu0
        %v1023 = vadd.f32 %v1003, %v1022
        %1024 = vdwg.mxu0
        %v1025 = vmax.f32 %v963, %v1023
        %v1026 = vld [vmem:[%s2] sm:$0x1]
        %v1028 = vperm.slane %v1026, 0
        %v1030 = vadd.f32 %v1025, %v1028
        %v1031 = vld [vmem:[%s3] sm:$0xff]
        %v1032 = vld [vmem:[%s3 + $0x8] sm:$0xff]
        %v1033 = vld [vmem:[%s3 + $0x10] sm:$0xff]
        %v1034 = vld [vmem:[%s3 + $0x18] sm:$0xff]
        %v1035 = vld [vmem:[%s3 + $0x20] sm:$0xff]
        %v1036 = vld [vmem:[%s3 + $0x28] sm:$0xff]
        %v1037 = vld [vmem:[%s4] sm:$0x1]
        %v1039 = vperm.slane %v1037, 0
        %vm1041 = vcmask 392192
        %v1043 = vsel %vm1041, %v1030, 0
        %1045 = vmatpush.msra.mxu0 0.0
        %1046 = vmatpush.msra.mxu0 0.0
        %1047 = vmatpush.msra.mxu0 0.0
        %1048 = vmatpush.msra.mxu0 0.0
        %1049 = vmatpush.msra.mxu0 0.0
        %1050 = vmatpush.msra.mxu0 0.0
        %1051 = vmatpush.msra.mxu0 0.0
        %1052 = vmatpush.msra.mxu0 0.0
        %1053 = vmatpush.msra.mxu0 0.0
        %1054 = vmatpush.msra.mxu0 0.0
        %1055 = vmatpush.msra.mxu0 %v1036
        %1056 = vmatpush.msra.mxu0 %v1035
        %1057 = vmatpush.msra.mxu0 %v1034
        %1058 = vmatpush.msra.mxu0 %v1033
        %1059 = vmatpush.msra.mxu0 %v1032
        %1060 = vmatpush.msra.mxu0 %v1031
        %1061 = vmatmul.f32.gmra.mxu0 %v1043
        %v1062 = vpop.f32.mrf.mxu0
        %v1063 = vadd.f32 %v1039, %v1062
        %1064 = vdwg.mxu0
        %v1065 = vmax.f32 %v1063, 0.0
        %v1066 = vld [vmem:[%s5] sm:$0xff]
        %v1067 = vld [vmem:[%s5 + $0x8] sm:$0xff]
        %v1068 = vld [vmem:[%s5 + $0x10] sm:$0xff]
        %v1069 = vld [vmem:[%s5 + $0x18] sm:$0xff]
        %v1070 = vld [vmem:[%s6] sm:$0x1]
        %v1072 = vperm.slane %v1070, 0
        %vm1074 = vcmask 261120
        %v1076 = vsel %vm1074, %v1065, 0
        %1078 = vmatpush.msra.mxu0 0.0
        %1079 = vmatpush.msra.mxu0 0.0
        %1080 = vmatpush.msra.mxu0 0.0
        %1081 = vmatpush.msra.mxu0 0.0
        %1082 = vmatpush.msra.mxu0 0.0
        %1083 = vmatpush.msra.mxu0 0.0
        %1084 = vmatpush.msra.mxu0 0.0
        %1085 = vmatpush.msra.mxu0 0.0
        %1086 = vmatpush.msra.mxu0 0.0
        %1087 = vmatpush.msra.mxu0 0.0
        %1088 = vmatpush.msra.mxu0 0.0
        %1089 = vmatpush.msra.mxu0 0.0
        %1090 = vmatpush.msra.mxu0 %v1069
        %1091 = vmatpush.msra.mxu0 %v1068
        %1092 = vmatpush.msra.mxu0 %v1067
        %1093 = vmatpush.msra.mxu0 %v1066
        %1094 = vmatmul.f32.gmra.mxu0 %v1076
        %v1095 = vpop.f32.mrf.mxu0
        %v1096 = vadd.f32 %v1072, %v1095
        %1097 = vdwg.mxu0
        %1098 = vmax.xlane.f32.xlu0 %v1096
        %v1099 = vpop.xlane.xlu0 %1098
        %v1100 = vsub.f32 %v1096, %v1099
        %v1101 = vmul.f32 %v1100, 1.442695
        %v1102 = vpow.pop %v1101
        %1103 = vadd.xlane.f32.xlu0 %v1102
        %v1104 = vpop.xlane.xlu0 %1103
        %v1105 = vrcp.pop %v1104
        %v1106 = vmul.f32 %v1102, %v1105
        %1107 = vst [vmem:[%s271] sm:$0xff] %v1106
        %s1108 = sand.u32 %s181, 1
        %s1109 = scalar_lea.sflag [#allocation3], %s1108
        %s1110 = sand.u32 %s181, 1
        %s1111 = smul.addr %s1110, 8
        %s1112 = scalar_lea.vmem [#allocation2], %s1111
        // Predicated region
        $region49: #{tpu_custom_call.1} parent=47 // pred_check
          %p1113 = pneg %p191
        $region50: #{tpu_custom_call.1} parent=47 // pred_check_branch
          %1115 = sbr.rel (%p1113) target = $region52
        $region51: #{tpu_custom_call.1} parent=47 // pred_region
          %1117 = vsyncadd %s1109, 0
          %s1118 = smul.addr %s21, 8
          %s1119 = scalar_lea.hbm %s7, %s1118
          %s1121 = sshll.u32 %s1112, 4
          %s1122 = int_to_ptr.vmem [resolvable:$true] %s1121
          %s1123 = sshll.u32 %s1119, 4
          %s1124 = int_to_ptr.hbm [resolvable:$true] %s1123
          %1126 = dma.vmem_to_hbm [thread:$0]  %s1122, 128, %s1124, %s1109
        $region52: #{tpu_custom_call.1} parent=47 // pred_fallthru
          _
      $region48: #{tpu_custom_call.1} parent=5 // pred_fallthru
        _
      %p1127 = scmp.le.s32.totalorder 2, %s16
      // Predicated region
      $region53: #{tpu_custom_call.1} parent=5 // pred_check
        %p1128 = pneg %p1127
      $region54: #{tpu_custom_call.1} parent=5 // pred_check_branch
        %1130 = sbr.rel (%p1128) target = $region56
      $region55: #{tpu_custom_call.1} parent=5 // pred_region
        %s1131 = ssub.s32 %s16, 2
        // Predicated region
        $region57: #{tpu_custom_call.1} parent=55 // pred_check
          %p1132 = pneg %p197
        $region58: #{tpu_custom_call.1} parent=55 // pred_check_branch
          %1134 = sbr.rel (%p1132) target = $region60
        $region59: #{tpu_custom_call.1} parent=55 // pred_region
          %s1135 = sand.u32 %s182, 1
          %s1136 = scalar_lea.sflag [#allocation3], %s1135
          %s1137 = sand.u32 %s182, 1
          %s1138 = smul.addr %s1137, 8
          %s1139 = scalar_lea.vmem [#allocation2], %s1138
          %1141 = dma.done %s1136, 128
        $region60: #{tpu_custom_call.1} parent=55 // pred_fallthru
          _
      $region56: #{tpu_custom_call.1} parent=5 // pred_fallthru
        _
    $region6: #{tpu_custom_call.1} parent=1 // loop_footer
      %s20 = sadd.s32 1, %s16
    $region7: #{tpu_custom_call.1} parent=1 // loop_footer_branch
      %15 = sbr.rel target = $region3
    $region8: #{tpu_custom_call.1} parent=1 // loop_exit
      _
    %1142 = vsyncpa [#allocation3], 1
    %s1143 = scalar_lea.sflag [#allocation3], 1
    %1144 = vsyncpa %s1143, 1

</llo_original>
